<compile_context>
chip_gen: v7x
topology: tpu7x:2x2x1
jax: 0.10.0
libtpu: 0.0.40
codegen_flags: <defaults>
</compile_context>

<pallas_src>
import math

import jax
import jax.numpy as jnp
from jax.experimental import pallas as pl
from jax.experimental.pallas import tpu as pltpu


def _round_up(x, m):
    return ((x + m - 1) // m) * m


def _vmem_capacity_bytes():
    """Physical VMEM per TensorCore; conservative fallback if unqueryable."""
    try:
        info = pltpu.get_tpu_info()
        cap = getattr(info, "vmem_capacity_bytes", None)
        if cap:
            return int(cap)
    except Exception:
        pass
    return 64 * 1024 * 1024  # v7x per-TC (most restrictive generation)


def _select_tiles(d_model, dff, x_it, w_it, out_it, budget_bytes):
    """Pick (tm, tf) maximizing arithmetic intensity under a VMEM budget.

    Working set per grid step (double-buffered inputs/outputs + f32 scratch):
      x: 2*tm*dm, w1a+w1b: 2*2*dm*tf, w2: 2*tf*dm, out: 2*tm*dm, acc: tm*dm*4.
    tm is the dominant lever (weights are re-streamed per row tile), tf only
    controls the reduction chunk count, so we prefer big tm then big tf.
    """
    b_it = w_it
    dff128 = _round_up(dff, 128)

    def working_set(tm, tf):
        return (2 * tm * d_model * x_it            # x blocks (double-buffered)
                + 2 * 2 * d_model * tf * w_it      # w1a + w1b blocks
                + 2 * tf * d_model * w_it          # w2 blocks
                + 2 * (2 * tf + d_model) * b_it    # biases (tiny)
                + 2 * tm * d_model * out_it        # output blocks
                + tm * d_model * 4)                # f32 accumulator scratch

    tm_cands = [1024, 768, 640, 512, 384, 256, 128, 64, 32, 16, 8]
    tf_cands = [1024, 512, 256, 128]
    for tm in tm_cands:
        for tf in tf_cands:
            tf_e = min(tf, dff128)
            if working_set(tm, tf_e) <= budget_bytes:
                return tm, tf
    return 8, 128  # last resort; compiler will complain if even this is too big


def _ffn_kernel(x_ref, w1a_ref, b1a_ref, w1b_ref, b1b_ref, w2_ref, b2_ref,
                o_ref, acc_ref):
    # x_ref:   (tm, d_model)           native dtype
    # w1a_ref: (d_model, tf)  b1a_ref: (1, tf)    -> x1 half
    # w1b_ref: (d_model, tf)  b1b_ref: (1, tf)    -> x2 (gate) half
    # w2_ref:  (tf, d_model)  b2_ref:  (1, d_model)
    # acc_ref: (tm, d_model) f32 scratch accumulator (persists across dff chunks)
    f = pl.program_id(1)
    nf = pl.num_programs(1)

    x = x_ref[...]  # native dtype -> native MXU inputs, f32 accumulation

    x1 = jnp.dot(x, w1a_ref[...], preferred_element_type=jnp.float32)
    x1 = x1 + b1a_ref[...].astype(jnp.float32)
    x2 = jnp.dot(x, w1b_ref[...], preferred_element_type=jnp.float32)
    x2 = x2 + b1b_ref[...].astype(jnp.float32)

    # exact (erf-based) GELU in f32, matching torch.nn.functional.gelu default
    g = 0.5 * x2 * (1.0 + jax.lax.erf(x2 * jnp.float32(0.7071067811865476)))

    # cast gated activation to the weight dtype so the second matmul gets
    # native (e.g. bf16) MXU inputs; accumulate the partial product in f32.
    gated = (x1 * g).astype(w2_ref.dtype)
    partial = jnp.dot(gated, w2_ref[...], preferred_element_type=jnp.float32)

    # No zero-init pass: first chunk overwrites, later chunks accumulate.
    @pl.when(f == 0)
    def _():
        acc_ref[...] = partial

    @pl.when(f > 0)
    def _():
        acc_ref[...] += partial

    @pl.when(f == nf - 1)
    def _():
        o_ref[...] = (acc_ref[...] + b2_ref[...].astype(jnp.float32)).astype(o_ref.dtype)


def feed_forward(x, w1, b1, w2, b2, *, compute_dtype=None):
    """x: [..., d_model] -> [..., d_model] via GeGLU feed-forward.

    w1: (d_model, 2*dff), b1: (2*dff,), w2: (dff, d_model), b2: (d_model,)
    compute_dtype: optionally cast x / weights (e.g. to bf16) for full MXU rate
    and halved weight HBM traffic; default None preserves input dtypes exactly.
    """
    orig_shape = x.shape
    d_model = orig_shape[-1]
    dff = w2.shape[0]

    if compute_dtype is not None:
        x = x.astype(compute_dtype)
        w1 = w1.astype(compute_dtype)
        w2 = w2.astype(compute_dtype)
    # TODO(synk): consider defaulting compute_dtype=bf16 on v6e/v7x if the
    # accuracy budget allows (weights are the HBM-traffic bottleneck).

    # Split the fused first linear into its two gate halves (removes in-kernel
    # h[:, :dff]/h[:, dff:] slicing and lets each half be chunked along dff).
    w1a, w1b = w1[:, :dff], w1[:, dff:]
    b1a, b1b = b1[:dff].reshape(1, dff), b1[dff:].reshape(1, dff)
    b2_2d = b2.reshape(1, d_model)

    x2d = x.reshape(-1, d_model)
    M = x2d.shape[0]

    x_it = jnp.dtype(x2d.dtype).itemsize
    w_it = jnp.dtype(w1.dtype).itemsize
    out_it = x_it
    b_it = jnp.dtype(b1.dtype).itemsize

    # ---- Generation-aware tile selection from the VMEM budget -------------
    vmem_cap = _vmem_capacity_bytes()
    vmem_limit = int(vmem_cap * 3 // 4)          # ~96 MiB on v5e/v6e, ~48 MiB on v7x
    budget = max(vmem_limit - (4 << 20), 4 << 20)  # headroom for compiler scratch
    tm_sel, tf_sel = _select_tiles(d_model, dff, x_it, w_it, out_it, budget)

    # ---- Row tiling: sublane-pack-aware padding, minimal padded-row work ---
    pack = max(8, 32 // x_it)                    # 8 (f32), 16 (bf16), 32 (8-bit)
    n_row = max(1, -(-M // tm_sel))              # ceil(M / tm_sel)
    tm_eff = min(tm_sel, _round_up(-(-M // n_row), pack))
    tm_eff = max(tm_eff, pack if M >= pack else _round_up(M, 8))
    Mp = _round_up(M, tm_eff)
    if Mp != M:
        x2d = jnp.pad(x2d, ((0, Mp - M), (0, 0)))

    # ---- dff chunking keeps the VMEM working set bounded -------------------
    if dff <= tf_sel:
        tf_eff, dffp = dff, dff
    else:
        tf_eff = tf_sel                          # multiple of 128 -> lane tiling ok
        dffp = _round_up(dff, tf_eff)
    if dffp != dff:
        pad_f = dffp - dff
        w1a = jnp.pad(w1a, ((0, 0), (0, pad_f)))
        w1b = jnp.pad(w1b, ((0, 0), (0, pad_f)))
        b1a = jnp.pad(b1a, ((0, 0), (0, pad_f)))
        b1b = jnp.pad(b1b, ((0, 0), (0, pad_f)))
        w2p = jnp.pad(w2, ((0, pad_f), (0, 0)))
    else:
        w2p = w2

    grid = (Mp // tm_eff, dffp // tf_eff)
    n_row_tiles = grid[0]

    # ---- Cost estimate: include weight re-streaming per row tile -----------
    weight_bytes = ((w1a.size + w1b.size + w2p.size) * w_it
                    + (b1a.size + b1b.size + b2_2d.size) * b_it)
    cost = pl.CostEstimate(
        flops=6 * M * d_model * dff,             # 2*M*dm*(2*dff) + 2*M*dff*dm
        transcendentals=M * dff,                 # erf per gate element
        bytes_accessed=(x2d.size * x_it          # activations in
                        + Mp * d_model * out_it  # activations out
                        + n_row_tiles * weight_bytes),  # weights re-streamed per row tile
    )

    out = pl.pallas_call(
        _ffn_kernel,
        out_shape=jax.ShapeDtypeStruct((Mp, d_model), x.dtype),
        grid_spec=pltpu.PrefetchScalarGridSpec(
            num_scalar_prefetch=0,
            grid=grid,
            in_specs=[
                pl.BlockSpec((tm_eff, d_model), lambda i, f: (i, 0)),
                pl.BlockSpec((d_model, tf_eff), lambda i, f: (0, f)),
                pl.BlockSpec((1, tf_eff), lambda i, f: (0, f)),
                pl.BlockSpec((d_model, tf_eff), lambda i, f: (0, f)),
                pl.BlockSpec((1, tf_eff), lambda i, f: (0, f)),
                pl.BlockSpec((tf_eff, d_model), lambda i, f: (f, 0)),
                pl.BlockSpec((1, d_model), lambda i, f: (0, 0)),
            ],
            out_specs=pl.BlockSpec((tm_eff, d_model), lambda i, f: (i, 0)),
            scratch_shapes=[pltpu.VMEM((tm_eff, d_model), jnp.float32)],
        ),
        compiler_params=pltpu.CompilerParams(
            dimension_semantics=("parallel", "arbitrary"),
            vmem_limit_bytes=vmem_limit,
        ),
        cost_estimate=cost,
    )(x2d, w1a, b1a, w1b, b1b, w2p, b2_2d)

    out = out[:M]
    return out.reshape(orig_shape)


def _reference(x, w1, b1, w2, b2):
    h = x @ w1 + b1
    dff = w2.shape[0]
    x1, x2 = h[..., :dff], h[..., dff:]
    g = 0.5 * x2 * (1.0 + jax.lax.erf(x2 / jnp.sqrt(2.0)))
    return (x1 * g) @ w2 + b2


if __name__ == "__main__":
    batch, seq = 2, 8
    d_model, dim_feedforward = 32, 64

    key = jax.random.PRNGKey(0)
    kx, k1, k2, k3, k4 = jax.random.split(key, 5)

    x = jax.random.normal(kx, (batch, seq, d_model), dtype=jnp.float32)

    # Shapes match nn.Linear(d_model, 2*dff) and nn.Linear(dff, d_model),
    # stored as [in, out] so the kernel computes x @ W + b.
    w1 = jax.random.normal(k1, (d_model, 2 * dim_feedforward), jnp.float32) * 0.05
    b1 = jax.random.normal(k2, (2 * dim_feedforward,), jnp.float32) * 0.01
    w2 = jax.random.normal(k3, (dim_feedforward, d_model), jnp.float32) * 0.05
    b2 = jax.random.normal(k4, (d_model,), jnp.float32) * 0.01

    out = feed_forward(x, w1, b1, w2, b2)
    out = jax.block_until_ready(out)

    ref = _reference(x, w1, b1, w2, b2)
    assert out.shape == (batch, seq, d_model)
    assert jnp.allclose(out, ref, atol=1e-4, rtol=1e-4)

    print("KERNEL_OK")
</pallas_src>

<mosaic_0001>
module attributes {stable_mosaic.version = 11 : i64} {
  func.func @_ffn_kernel(%arg0: i32, %arg1: i32, %arg2: memref<16x32xf32, #tpu.memory_space<vmem>>, %arg3: memref<32x64xf32, #tpu.memory_space<vmem>>, %arg4: memref<1x64xf32, #tpu.memory_space<vmem>>, %arg5: memref<32x64xf32, #tpu.memory_space<vmem>>, %arg6: memref<1x64xf32, #tpu.memory_space<vmem>>, %arg7: memref<64x32xf32, #tpu.memory_space<vmem>>, %arg8: memref<1x32xf32, #tpu.memory_space<vmem>>, %arg9: memref<16x32xf32, #tpu.memory_space<vmem>>, %arg10: memref<16x32xf32, #tpu.memory_space<vmem>>) attributes {dimension_semantics = [#tpu.dimension_semantics<parallel>, #tpu.dimension_semantics<arbitrary>], iteration_bounds = array<i64: 1, 1>, scalar_prefetch = 0 : i64, scratch_operands = 1 : i64, tpu.core_type = #tpu.core_type<tc>, window_params = [{transform_indices = @transform_0, window_bounds = array<i64: 16, 32>}, {transform_indices = @transform_1, window_bounds = array<i64: 32, 64>}, {transform_indices = @transform_2, window_bounds = array<i64: 1, 64>}, {transform_indices = @transform_3, window_bounds = array<i64: 32, 64>}, {transform_indices = @transform_4, window_bounds = array<i64: 1, 64>}, {transform_indices = @transform_5, window_bounds = array<i64: 64, 32>}, {pipeline_mode = #tpu.pipeline_mode<synchronous>, transform_indices = @transform_6, window_bounds = array<i64: 1, 32>}, {transform_indices = @transform_7, window_bounds = array<i64: 16, 32>}]} {
    %c0 = arith.constant 0 : index
    %c0_0 = arith.constant 0 : index
    %0 = vector.load %arg2[%c0, %c0_0] : memref<16x32xf32, #tpu.memory_space<vmem>>, vector<16x32xf32>
    %c0_1 = arith.constant 0 : index
    %c0_2 = arith.constant 0 : index
    %1 = vector.load %arg3[%c0_1, %c0_2] : memref<32x64xf32, #tpu.memory_space<vmem>>, vector<32x64xf32>
    %cst = arith.constant dense<0.000000e+00> : vector<16x64xf32>
    %2 = tpu.matmul %0, %1, %cst {dimension_numbers = #tpu.dot_dimension_numbers<[1], [0], [0], [1], [0, 0, 1, 1], [], []>} : vector<16x32xf32>, vector<32x64xf32>, vector<16x64xf32> -> vector<16x64xf32>
    %c0_3 = arith.constant 0 : index
    %c0_4 = arith.constant 0 : index
    %3 = vector.load %arg4[%c0_3, %c0_4] : memref<1x64xf32, #tpu.memory_space<vmem>>, vector<1x64xf32>
    %4 = vector.broadcast %3 : vector<1x64xf32> to vector<16x64xf32>
    %5 = arith.addf %2, %4 : vector<16x64xf32>
    %c0_5 = arith.constant 0 : index
    %c0_6 = arith.constant 0 : index
    %6 = vector.load %arg5[%c0_5, %c0_6] : memref<32x64xf32, #tpu.memory_space<vmem>>, vector<32x64xf32>
    %cst_7 = arith.constant dense<0.000000e+00> : vector<16x64xf32>
    %7 = tpu.matmul %0, %6, %cst_7 {dimension_numbers = #tpu.dot_dimension_numbers<[1], [0], [0], [1], [0, 0, 1, 1], [], []>} : vector<16x32xf32>, vector<32x64xf32>, vector<16x64xf32> -> vector<16x64xf32>
    %c0_8 = arith.constant 0 : index
    %c0_9 = arith.constant 0 : index
    %8 = vector.load %arg6[%c0_8, %c0_9] : memref<1x64xf32, #tpu.memory_space<vmem>>, vector<1x64xf32>
    %9 = vector.broadcast %8 : vector<1x64xf32> to vector<16x64xf32>
    %10 = arith.addf %7, %9 : vector<16x64xf32>
    %cst_10 = arith.constant 5.000000e-01 : f32
    %11 = vector.broadcast %cst_10 : f32 to vector<16x64xf32>
    %12 = arith.mulf %11, %10 : vector<16x64xf32>
    %cst_11 = arith.constant 0.707106769 : f32
    %13 = vector.broadcast %cst_11 : f32 to vector<16x64xf32>
    %14 = arith.mulf %10, %13 : vector<16x64xf32>
    %15 = math.erf %14 : vector<16x64xf32>
    %cst_12 = arith.constant 1.000000e+00 : f32
    %16 = vector.broadcast %cst_12 : f32 to vector<16x64xf32>
    %17 = arith.addf %16, %15 : vector<16x64xf32>
    %18 = arith.mulf %12, %17 : vector<16x64xf32>
    %19 = arith.mulf %5, %18 : vector<16x64xf32>
    %c0_13 = arith.constant 0 : index
    %c0_14 = arith.constant 0 : index
    %20 = vector.load %arg7[%c0_13, %c0_14] : memref<64x32xf32, #tpu.memory_space<vmem>>, vector<64x32xf32>
    %cst_15 = arith.constant dense<0.000000e+00> : vector<16x32xf32>
    %21 = tpu.matmul %19, %20, %cst_15 {dimension_numbers = #tpu.dot_dimension_numbers<[1], [0], [0], [1], [0, 0, 1, 1], [], []>} : vector<16x64xf32>, vector<64x32xf32>, vector<16x32xf32> -> vector<16x32xf32>
    %c0_i32 = arith.constant 0 : i32
    %22 = arith.cmpi eq, %arg1, %c0_i32 : i32
    %23 = arith.extui %22 : i1 to i32
    %c0_i32_16 = arith.constant 0 : i32
    %24 = arith.cmpi ne, %23, %c0_i32_16 : i32
    scf.if %24 {
      %c0_21 = arith.constant 0 : index
      %c0_22 = arith.constant 0 : index
      %31 = vector.load %arg10[%c0_21, %c0_22] : memref<16x32xf32, #tpu.memory_space<vmem>>, vector<16x32xf32>
      tpu.vector_store %arg10[%c0_21, %c0_22], %21 {strides = array<i32>} : memref<16x32xf32, #tpu.memory_space<vmem>>, vector<16x32xf32>,
    } else {
    }
    %c0_i32_17 = arith.constant 0 : i32
    %25 = arith.cmpi sgt, %arg1, %c0_i32_17 : i32
    %26 = arith.extui %25 : i1 to i32
    %c0_i32_18 = arith.constant 0 : i32
    %27 = arith.cmpi ne, %26, %c0_i32_18 : i32
    scf.if %27 {
      %c0_21 = arith.constant 0 : index
      %c0_22 = arith.constant 0 : index
      %31 = vector.load %arg10[%c0_21, %c0_22] : memref<16x32xf32, #tpu.memory_space<vmem>>, vector<16x32xf32>
      %32 = arith.addf %31, %21 : vector<16x32xf32>
      %c0_23 = arith.constant 0 : index
      %c0_24 = arith.constant 0 : index
      %33 = vector.load %arg10[%c0_23, %c0_24] : memref<16x32xf32, #tpu.memory_space<vmem>>, vector<16x32xf32>
      tpu.vector_store %arg10[%c0_23, %c0_24], %32 {strides = array<i32>} : memref<16x32xf32, #tpu.memory_space<vmem>>, vector<16x32xf32>,
    } else {
    }
    %c0_i32_19 = arith.constant 0 : i32
    %28 = arith.cmpi eq, %arg1, %c0_i32_19 : i32
    %29 = arith.extui %28 : i1 to i32
    %c0_i32_20 = arith.constant 0 : i32
    %30 = arith.cmpi ne, %29, %c0_i32_20 : i32
    scf.if %30 {
      %c0_21 = arith.constant 0 : index
      %c0_22 = arith.constant 0 : index
      %31 = vector.load %arg10[%c0_21, %c0_22] : memref<16x32xf32, #tpu.memory_space<vmem>>, vector<16x32xf32>
      %c0_23 = arith.constant 0 : index
      %c0_24 = arith.constant 0 : index
      %32 = vector.load %arg8[%c0_23, %c0_24] : memref<1x32xf32, #tpu.memory_space<vmem>>, vector<1x32xf32>
      %33 = vector.broadcast %32 : vector<1x32xf32> to vector<16x32xf32>
      %34 = arith.addf %31, %33 : vector<16x32xf32>
      %c0_25 = arith.constant 0 : index
      %c0_26 = arith.constant 0 : index
      %35 = vector.load %arg9[%c0_25, %c0_26] : memref<16x32xf32, #tpu.memory_space<vmem>>, vector<16x32xf32>
      tpu.vector_store %arg9[%c0_25, %c0_26], %34 {strides = array<i32>} : memref<16x32xf32, #tpu.memory_space<vmem>>, vector<16x32xf32>,
    } else {
    }
    return
  }
  func.func @transform_0(%arg0: i32, %arg1: i32) -> (i32, i32) {
    %c0_i32 = arith.constant 0 : i32
    %c0_i32_0 = arith.constant 0 : i32
    return %arg0, %c0_i32 : i32, i32
  }
  func.func @transform_1(%arg0: i32, %arg1: i32) -> (i32, i32) {
    %c0_i32 = arith.constant 0 : i32
    %c0_i32_0 = arith.constant 0 : i32
    return %c0_i32, %arg1 : i32, i32
  }
  func.func @transform_2(%arg0: i32, %arg1: i32) -> (i32, i32) {
    %c0_i32 = arith.constant 0 : i32
    %c0_i32_0 = arith.constant 0 : i32
    return %c0_i32, %arg1 : i32, i32
  }
  func.func @transform_3(%arg0: i32, %arg1: i32) -> (i32, i32) {
    %c0_i32 = arith.constant 0 : i32
    %c0_i32_0 = arith.constant 0 : i32
    return %c0_i32, %arg1 : i32, i32
  }
  func.func @transform_4(%arg0: i32, %arg1: i32) -> (i32, i32) {
    %c0_i32 = arith.constant 0 : i32
    %c0_i32_0 = arith.constant 0 : i32
    return %c0_i32, %arg1 : i32, i32
  }
  func.func @transform_5(%arg0: i32, %arg1: i32) -> (i32, i32) {
    %c0_i32 = arith.constant 0 : i32
    %c0_i32_0 = arith.constant 0 : i32
    return %arg1, %c0_i32 : i32, i32
  }
  func.func @transform_6(%arg0: i32, %arg1: i32) -> (i32, i32) {
    %c0_i32 = arith.constant 0 : i32
    %c0_i32_0 = arith.constant 0 : i32
    %c0_i32_1 = arith.constant 0 : i32
    return %c0_i32, %c0_i32_0 : i32, i32
  }
  func.func @transform_7(%arg0: i32, %arg1: i32) -> (i32, i32) {
    %c0_i32 = arith.constant 0 : i32
    %c0_i32_0 = arith.constant 0 : i32
    return %arg0, %c0_i32 : i32, i32
  }
}

</mosaic_0001>

<llo_original>
// kernel: tpu_custom_call.1
$region0: #{tpu_custom_call.1}
  #allocation0 [shape = 'u32[]', space=smem, size = 0x4, offset = 0x4, fixed_abs, tag = 'smem constant byte address 0x4 - core index']
  #allocation1 [shape = 'u32[144,128]{1,0:T(1,128)}', space=vmem, size = 0x12000, scoped, tag = 'internal scratch']
  #allocation2 [shape = 'f32[16,32]{1,0:T(8,128)}', space=vmem, size = 0x2000, scoped, tag = 'scratch operand']
  %s0 = inlined_call_operand.vmem [shape: f32[16,32], index: 0, kind: input, shape index: {}]
  %s1 = inlined_call_operand.vmem [shape: f32[32,64], index: 1, kind: input, shape index: {}]
  %s2 = inlined_call_operand.vmem [shape: f32[1,64], index: 2, kind: input, shape index: {}]
  %s3 = inlined_call_operand.vmem [shape: f32[32,64], index: 3, kind: input, shape index: {}]
  %s4 = inlined_call_operand.vmem [shape: f32[1,64], index: 4, kind: input, shape index: {}]
  %s5 = inlined_call_operand.vmem [shape: f32[64,32], index: 5, kind: input, shape index: {}]
  %s6 = inlined_call_operand.vmem [shape: f32[1,32], index: 6, kind: input, shape index: {}]
  %s7 = inlined_call_operand.hbm [shape: f32[16,32], index: 7, kind: output, shape index: {}]
  %s8 = sld [smem:[#allocation0]]
  $region50: #{tpu_custom_call.1} parent=0
    _
  %s10 = ssub.s32 1, %s8
  %s11 = scalar_select 0, %s10, %s8
  $region1: #{tpu_custom_call.1} parent=0
    #allocation3 [shape = 'u8[8192]{0}', space=vmem, size = 0x2000, scoped, tag = 'output window, operand 0, single buffered']
    #allocation4 [shape = 's32[1]{0}', space=sflag, size = 0x4, scoped, tag = 'scoped memory for tpu_custom_call.1']
    %12 = vsyncpa [#allocation4], 0
    // Predicated region
    $region2: #{tpu_custom_call.1} parent=1 // pred_check
      _
    $region3: #{tpu_custom_call.1} parent=1 // pred_check_branch
      %14 = sbr.rel (0) target = $region5
    $region4: #{tpu_custom_call.1} parent=1 // pred_region
      _
    $region5: #{tpu_custom_call.1} parent=1 // pred_fallthru
      _
    // Predicated region
    $region6: #{tpu_custom_call.1} parent=1 // pred_check
      _
    $region7: #{tpu_custom_call.1} parent=1 // pred_check_branch
      %16 = sbr.rel (0) target = $region9
    $region8: #{tpu_custom_call.1} parent=1 // pred_region
      _
    $region9: #{tpu_custom_call.1} parent=1 // pred_fallthru
      _
    // Predicated region
    $region10: #{tpu_custom_call.1} parent=1 // pred_check
      _
    $region11: #{tpu_custom_call.1} parent=1 // pred_check_branch
      %18 = sbr.rel (0) target = $region13
    $region12: #{tpu_custom_call.1} parent=1 // pred_region
      _
    $region13: #{tpu_custom_call.1} parent=1 // pred_fallthru
      _
    // Predicated region
    $region14: #{tpu_custom_call.1} parent=1 // pred_check
      _
    $region15: #{tpu_custom_call.1} parent=1 // pred_check_branch
      %20 = sbr.rel (0) target = $region17
    $region16: #{tpu_custom_call.1} parent=1 // pred_region
      _
    $region17: #{tpu_custom_call.1} parent=1 // pred_fallthru
      _
    // Predicated region
    $region18: #{tpu_custom_call.1} parent=1 // pred_check
      _
    $region19: #{tpu_custom_call.1} parent=1 // pred_check_branch
      %22 = sbr.rel (0) target = $region21
    $region20: #{tpu_custom_call.1} parent=1 // pred_region
      _
    $region21: #{tpu_custom_call.1} parent=1 // pred_fallthru
      _
    // Predicated region
    $region22: #{tpu_custom_call.1} parent=1 // pred_check
      _
    $region23: #{tpu_custom_call.1} parent=1 // pred_check_branch
      %24 = sbr.rel (0) target = $region25
    $region24: #{tpu_custom_call.1} parent=1 // pred_region
      _
    $region25: #{tpu_custom_call.1} parent=1 // pred_fallthru
      _
    // Predicated region
    $region26: #{tpu_custom_call.1} parent=1 // pred_check
      _
    $region27: #{tpu_custom_call.1} parent=1 // pred_check_branch
      %26 = sbr.rel (0) target = $region29
    $region28: #{tpu_custom_call.1} parent=1 // pred_region
      _
    $region29: #{tpu_custom_call.1} parent=1 // pred_fallthru
      _
    %v27 = vld [vmem:[%s0] sm:$0xff]
    %v28 = vld [vmem:[%s0 + $0x8] sm:$0xff]
    %v29 = vld [vmem:[%s1] sm:$0xff]
    %v30 = vld [vmem:[%s1 + $0x8] sm:$0xff]
    %v31 = vld [vmem:[%s1 + $0x10] sm:$0xff]
    %v32 = vld [vmem:[%s1 + $0x18] sm:$0xff]
    %v33 = vld [vmem:[%s2] sm:$0x1]
    %v35 = vlaneseq
    %v36 = vshrl.u32 %v35, 7
    %v37 = vsub.s32 0, %v36
    %v38 = vrot.slane %v33, %v37
    %vm40 = vcmask 261120
    %v42 = vsel %vm40, %v27, 0
    %v45 = vsel %vm40, %v28, 0
    %47 = vmatprep.subr.mxu0 0.0
    %48 = vmatpush1.msra.mxu0 %v29
    %49 = vmatprep.subr.mxu0 0.0
    %50 = vmatpush1.msra.mxu0 %v30
    %51 = vmatprep.subr.mxu0 0.0
    %52 = vmatpush1.msra.mxu0 %v31
    %53 = vmatprep.subr.mxu0 0.0
    %54 = vmatpush1.msra.mxu0 %v32
    %55 = vmatprep.subr.mxu0 0.0
    %56 = vmatpush1.msra.mxu0 0.0
    %57 = vmatprep.subr.mxu0 0.0
    %58 = vmatpush1.msra.mxu0 0.0
    %59 = vmatprep.subr.mxu0 0.0
    %60 = vmatpush1.msra.mxu0 0.0
    %61 = vmatprep.subr.mxu0 0.0
    %62 = vmatpush1.msra.mxu0 0.0
    %63 = vmatprep.subr.mxu0 0.0
    %64 = vmatpush1.msra.mxu0 0.0
    %65 = vmatprep.subr.mxu0 0.0
    %66 = vmatpush1.msra.mxu0 0.0
    %67 = vmatprep.subr.mxu0 0.0
    %68 = vmatpush1.msra.mxu0 0.0
    %69 = vmatprep.subr.mxu0 0.0
    %70 = vmatpush1.msra.mxu0 0.0
    %71 = vmatprep.subr.mxu0 0.0
    %72 = vmatpush1.msra.mxu0 0.0
    %73 = vmatprep.subr.mxu0 0.0
    %74 = vmatpush1.msra.mxu0 0.0
    %75 = vmatprep.subr.mxu0 0.0
    %76 = vmatpush1.msra.mxu0 0.0
    %77 = vmatprep.subr.mxu0 0.0
    %78 = vmatpush1.msra.mxu0 0.0
    %79 = vmatprep.subr.mxu0 0.0
    %80 = vmatpush1.msra.mxu0 0.0
    %81 = vmatprep.subr.mxu0 0.0
    %82 = vmatpush1.msra.mxu0 0.0
    %83 = vmatprep.subr.mxu0 0.0
    %84 = vmatpush1.msra.mxu0 0.0
    %85 = vmatprep.subr.mxu0 0.0
    %86 = vmatpush1.msra.mxu0 0.0
    %87 = vmatprep.subr.mxu0 0.0
    %88 = vmatpush1.msra.mxu0 0.0
    %89 = vmatprep.subr.mxu0 0.0
    %90 = vmatpush1.msra.mxu0 0.0
    %91 = vmatprep.subr.mxu0 0.0
    %92 = vmatpush1.msra.mxu0 0.0
    %93 = vmatprep.subr.mxu0 0.0
    %94 = vmatpush1.msra.mxu0 0.0
    %95 = vmatprep.subr.mxu0 0.0
    %96 = vmatpush1.msra.mxu0 0.0
    %97 = vmatprep.subr.mxu0 0.0
    %98 = vmatpush1.msra.mxu0 0.0
    %99 = vmatprep.subr.mxu0 0.0
    %100 = vmatpush1.msra.mxu0 0.0
    %101 = vmatprep.subr.mxu0 0.0
    %102 = vmatpush1.msra.mxu0 0.0
    %103 = vmatprep.subr.mxu0 0.0
    %104 = vmatpush1.msra.mxu0 0.0
    %105 = vmatprep.subr.mxu0 0.0
    %106 = vmatpush1.msra.mxu0 0.0
    %107 = vmatprep.subr.mxu0 0.0
    %108 = vmatpush1.msra.mxu0 0.0
    %109 = vmatprep.subr.mxu0 0.0
    %110 = vmatpush1.msra.mxu0 0.0
    %111 = vmatprep.mubr.f32.mxu0 0.0
    %112 = vmatmul.mubr.f32.gmra.mrb[0].mxu0 %v42
    %v113 = vpop.f32.mrb[0].mxu0
    %v114 = vadd.f32 %v38, %v113
    %v115 = vpop.f32.mrb[0].mxu0
    %116 = vmatprep.mubr.f32.mxu0 0.0
    %117 = vmatmul.mubr.f32.gmra.mrb[0].mxu0 %v45
    %v118 = vpop.f32.mrb[0].mxu0
    %v119 = vadd.f32 %v38, %v118
    %v120 = vpop.f32.mrb[0].mxu0
    %121 = vdwg.mxu0
    %v122 = vld [vmem:[%s3] sm:$0xff]
    %v123 = vld [vmem:[%s3 + $0x8] sm:$0xff]
    %v124 = vld [vmem:[%s3 + $0x10] sm:$0xff]
    %v125 = vld [vmem:[%s3 + $0x18] sm:$0xff]
    %v126 = vld [vmem:[%s4] sm:$0x1]
    %v128 = vlaneseq
    %v129 = vshrl.u32 %v128, 7
    %v130 = vsub.s32 0, %v129
    %v131 = vrot.slane %v126, %v130
    %133 = vmatprep.subr.mxu0 0.0
    %134 = vmatpush1.msra.mxu0 %v122
    %135 = vmatprep.subr.mxu0 0.0
    %136 = vmatpush1.msra.mxu0 %v123
    %137 = vmatprep.subr.mxu0 0.0
    %138 = vmatpush1.msra.mxu0 %v124
    %139 = vmatprep.subr.mxu0 0.0
    %140 = vmatpush1.msra.mxu0 %v125
    %141 = vmatprep.subr.mxu0 0.0
    %142 = vmatpush1.msra.mxu0 0.0
    %143 = vmatprep.subr.mxu0 0.0
    %144 = vmatpush1.msra.mxu0 0.0
    %145 = vmatprep.subr.mxu0 0.0
    %146 = vmatpush1.msra.mxu0 0.0
    %147 = vmatprep.subr.mxu0 0.0
    %148 = vmatpush1.msra.mxu0 0.0
    %149 = vmatprep.subr.mxu0 0.0
    %150 = vmatpush1.msra.mxu0 0.0
    %151 = vmatprep.subr.mxu0 0.0
    %152 = vmatpush1.msra.mxu0 0.0
    %153 = vmatprep.subr.mxu0 0.0
    %154 = vmatpush1.msra.mxu0 0.0
    %155 = vmatprep.subr.mxu0 0.0
    %156 = vmatpush1.msra.mxu0 0.0
    %157 = vmatprep.subr.mxu0 0.0
    %158 = vmatpush1.msra.mxu0 0.0
    %159 = vmatprep.subr.mxu0 0.0
    %160 = vmatpush1.msra.mxu0 0.0
    %161 = vmatprep.subr.mxu0 0.0
    %162 = vmatpush1.msra.mxu0 0.0
    %163 = vmatprep.subr.mxu0 0.0
    %164 = vmatpush1.msra.mxu0 0.0
    %165 = vmatprep.subr.mxu0 0.0
    %166 = vmatpush1.msra.mxu0 0.0
    %167 = vmatprep.subr.mxu0 0.0
    %168 = vmatpush1.msra.mxu0 0.0
    %169 = vmatprep.subr.mxu0 0.0
    %170 = vmatpush1.msra.mxu0 0.0
    %171 = vmatprep.subr.mxu0 0.0
    %172 = vmatpush1.msra.mxu0 0.0
    %173 = vmatprep.subr.mxu0 0.0
    %174 = vmatpush1.msra.mxu0 0.0
    %175 = vmatprep.subr.mxu0 0.0
    %176 = vmatpush1.msra.mxu0 0.0
    %177 = vmatprep.subr.mxu0 0.0
    %178 = vmatpush1.msra.mxu0 0.0
    %179 = vmatprep.subr.mxu0 0.0
    %180 = vmatpush1.msra.mxu0 0.0
    %181 = vmatprep.subr.mxu0 0.0
    %182 = vmatpush1.msra.mxu0 0.0
    %183 = vmatprep.subr.mxu0 0.0
    %184 = vmatpush1.msra.mxu0 0.0
    %185 = vmatprep.subr.mxu0 0.0
    %186 = vmatpush1.msra.mxu0 0.0
    %187 = vmatprep.subr.mxu0 0.0
    %188 = vmatpush1.msra.mxu0 0.0
    %189 = vmatprep.subr.mxu0 0.0
    %190 = vmatpush1.msra.mxu0 0.0
    %191 = vmatprep.subr.mxu0 0.0
    %192 = vmatpush1.msra.mxu0 0.0
    %193 = vmatprep.subr.mxu0 0.0
    %194 = vmatpush1.msra.mxu0 0.0
    %195 = vmatprep.subr.mxu0 0.0
    %196 = vmatpush1.msra.mxu0 0.0
    %197 = vmatprep.mubr.f32.mxu0 0.0
    %198 = vmatmul.mubr.f32.gmra.mrb[0].mxu0 %v42
    %v199 = vpop.f32.mrb[0].mxu0
    %v200 = vadd.f32 %v131, %v199
    %v201 = vpop.f32.mrb[0].mxu0
    %202 = vmatprep.mubr.f32.mxu0 0.0
    %203 = vmatmul.mubr.f32.gmra.mrb[0].mxu0 %v45
    %v204 = vpop.f32.mrb[0].mxu0
    %v205 = vadd.f32 %v131, %v204
    %v206 = vpop.f32.mrb[0].mxu0
    %207 = vdwg.mxu0
    %v208 = vmul.f32 %v200, 0.5
    %v209 = vmul.f32 %v205, 0.5
    %v210 = vmul.f32 %v200, 0.70710677
    %v211 = vmul.f32 %v205, 0.70710677
    %v212 = verf.f32.pop %v210
    %v213 = verf.f32.pop %v211
    %v214 = vadd.f32 %v212, 1.0
    %v215 = vadd.f32 %v213, 1.0
    %v216 = vmul.f32 %v208, %v214
    %v217 = vmul.f32 %v209, %v215
    %v218 = vmul.f32 %v114, %v216
    %v219 = vmul.f32 %v119, %v217
    %v220 = vld [vmem:[%s5] sm:$0xff]
    %v221 = vld [vmem:[%s5 + $0x8] sm:$0xff]
    %v222 = vld [vmem:[%s5 + $0x10] sm:$0xff]
    %v223 = vld [vmem:[%s5 + $0x18] sm:$0xff]
    %v224 = vld [vmem:[%s5 + $0x20] sm:$0xff]
    %v225 = vld [vmem:[%s5 + $0x28] sm:$0xff]
    %v226 = vld [vmem:[%s5 + $0x30] sm:$0xff]
    %v227 = vld [vmem:[%s5 + $0x38] sm:$0xff]
    %vm228 = vcmask 523264
    %v230 = vsel %vm228, %v218, 0
    %v233 = vsel %vm228, %v219, 0
    %235 = vmatprep.subr.mxu0 0.0
    %236 = vmatpush1.msra.mxu0 %v220
    %237 = vmatprep.subr.mxu0 0.0
    %238 = vmatpush1.msra.mxu0 %v221
    %239 = vmatprep.subr.mxu0 0.0
    %240 = vmatpush1.msra.mxu0 %v222
    %241 = vmatprep.subr.mxu0 0.0
    %242 = vmatpush1.msra.mxu0 %v223
    %243 = vmatprep.subr.mxu0 0.0
    %244 = vmatpush1.msra.mxu0 %v224
    %245 = vmatprep.subr.mxu0 0.0
    %246 = vmatpush1.msra.mxu0 %v225
    %247 = vmatprep.subr.mxu0 0.0
    %248 = vmatpush1.msra.mxu0 %v226
    %249 = vmatprep.subr.mxu0 0.0
    %250 = vmatpush1.msra.mxu0 %v227
    %251 = vmatprep.subr.mxu0 0.0
    %252 = vmatpush1.msra.mxu0 0.0
    %253 = vmatprep.subr.mxu0 0.0
    %254 = vmatpush1.msra.mxu0 0.0
    %255 = vmatprep.subr.mxu0 0.0
    %256 = vmatpush1.msra.mxu0 0.0
    %257 = vmatprep.subr.mxu0 0.0
    %258 = vmatpush1.msra.mxu0 0.0
    %259 = vmatprep.subr.mxu0 0.0
    %260 = vmatpush1.msra.mxu0 0.0
    %261 = vmatprep.subr.mxu0 0.0
    %262 = vmatpush1.msra.mxu0 0.0
    %263 = vmatprep.subr.mxu0 0.0
    %264 = vmatpush1.msra.mxu0 0.0
    %265 = vmatprep.subr.mxu0 0.0
    %266 = vmatpush1.msra.mxu0 0.0
    %267 = vmatprep.subr.mxu0 0.0
    %268 = vmatpush1.msra.mxu0 0.0
    %269 = vmatprep.subr.mxu0 0.0
    %270 = vmatpush1.msra.mxu0 0.0
    %271 = vmatprep.subr.mxu0 0.0
    %272 = vmatpush1.msra.mxu0 0.0
    %273 = vmatprep.subr.mxu0 0.0
    %274 = vmatpush1.msra.mxu0 0.0
    %275 = vmatprep.subr.mxu0 0.0
    %276 = vmatpush1.msra.mxu0 0.0
    %277 = vmatprep.subr.mxu0 0.0
    %278 = vmatpush1.msra.mxu0 0.0
    %279 = vmatprep.subr.mxu0 0.0
    %280 = vmatpush1.msra.mxu0 0.0
    %281 = vmatprep.subr.mxu0 0.0
    %282 = vmatpush1.msra.mxu0 0.0
    %283 = vmatprep.subr.mxu0 0.0
    %284 = vmatpush1.msra.mxu0 0.0
    %285 = vmatprep.subr.mxu0 0.0
    %286 = vmatpush1.msra.mxu0 0.0
    %287 = vmatprep.subr.mxu0 0.0
    %288 = vmatpush1.msra.mxu0 0.0
    %289 = vmatprep.subr.mxu0 0.0
    %290 = vmatpush1.msra.mxu0 0.0
    %291 = vmatprep.subr.mxu0 0.0
    %292 = vmatpush1.msra.mxu0 0.0
    %293 = vmatprep.subr.mxu0 0.0
    %294 = vmatpush1.msra.mxu0 0.0
    %295 = vmatprep.subr.mxu0 0.0
    %296 = vmatpush1.msra.mxu0 0.0
    %297 = vmatprep.subr.mxu0 0.0
    %298 = vmatpush1.msra.mxu0 0.0
    %299 = vmatprep.mubr.f32.mxu0 0.0
    %300 = vmatmul.mubr.f32.gmra.mrb[0].mxu0 %v230
    %v301 = vpop.f32.mrb[0].mxu0
    %v302 = vadd.f32 0.0, %v301
    %v303 = vpop.f32.mrb[0].mxu0
    %304 = vmatprep.mubr.f32.mxu0 0.0
    %305 = vmatmul.mubr.f32.gmra.mrb[0].mxu0 %v233
    %v306 = vpop.f32.mrb[0].mxu0
    %v307 = vadd.f32 0.0, %v306
    %v308 = vpop.f32.mrb[0].mxu0
    %309 = vdwg.mxu0
    %p310 = scmp.eq.s32.totalorder 0, 0
    // Predicated region
    $region30: #{tpu_custom_call.1} parent=1 // pred_check
      %p311 = pneg %p310
    $region31: #{tpu_custom_call.1} parent=1 // pred_check_branch
      %313 = sbr.rel (%p311) target = $region33
    $region32: #{tpu_custom_call.1} parent=1 // pred_region
      %314 = vst.msk [vmem:[#allocation2] sm:$0xff] %vm40, %v302
      %315 = vst.msk [vmem:[#allocation2 + $0x8] sm:$0xff] %vm40, %v307
    $region33: #{tpu_custom_call.1} parent=1 // pred_fallthru
      _
    %p316 = scmp.gt.s32.totalorder 0, 0
    // Predicated region
    $region34: #{tpu_custom_call.1} parent=1 // pred_check
      %p317 = pneg %p316
    $region35: #{tpu_custom_call.1} parent=1 // pred_check_branch
      %319 = sbr.rel (%p317) target = $region37
    $region36: #{tpu_custom_call.1} parent=1 // pred_region
      %v320 = vld [vmem:[#allocation2] sm:$0xff]
      %v321 = vld [vmem:[#allocation2 + $0x8] sm:$0xff]
      %v322 = vadd.f32 %v320, %v302
      %v323 = vadd.f32 %v321, %v307
      %324 = vst.msk [vmem:[#allocation2] sm:$0xff] %vm40, %v322
      %325 = vst.msk [vmem:[#allocation2 + $0x8] sm:$0xff] %vm40, %v323
    $region37: #{tpu_custom_call.1} parent=1 // pred_fallthru
      _
    // Predicated region
    $region38: #{tpu_custom_call.1} parent=1 // pred_check
      %p326 = pneg %p310
    $region39: #{tpu_custom_call.1} parent=1 // pred_check_branch
      %328 = sbr.rel (%p326) target = $region41
    $region40: #{tpu_custom_call.1} parent=1 // pred_region
      %v329 = vld [vmem:[#allocation2] sm:$0xff]
      %v330 = vld [vmem:[#allocation2 + $0x8] sm:$0xff]
      %v331 = vld [vmem:[%s6] sm:$0x1]
      %v333 = vlaneseq
      %v334 = vshrl.u32 %v333, 7
      %v335 = vsub.s32 0, %v334
      %v336 = vrot.slane %v331, %v335
      %v338 = vadd.f32 %v329, %v336
      %v339 = vadd.f32 %v330, %v336
      %340 = vst.msk [vmem:[#allocation3] sm:$0xff] %vm40, %v338
      %341 = vst.msk [vmem:[#allocation3 + $0x8] sm:$0xff] %vm40, %v339
    $region41: #{tpu_custom_call.1} parent=1 // pred_fallthru
      _
    // Predicated region
    $region42: #{tpu_custom_call.1} parent=1 // pred_check
      _
    $region43: #{tpu_custom_call.1} parent=1 // pred_check_branch
      %343 = sbr.rel (0) target = $region45
    $region44: #{tpu_custom_call.1} parent=1 // pred_region
      %s345 = ssub.s32 256, 256
      %346 = vsyncadd [#allocation4], %s345
      %s347 = sshll.u32 [#allocation3], 4
      %s348 = int_to_ptr.vmem [resolvable:$true] %s347
      %353 = dma.vmem_to_hbm [thread:$0]  %s348, 256, %s7, [#allocation4], 128, 128, 8
    $region45: #{tpu_custom_call.1} parent=1 // pred_fallthru
      _
    // Predicated region
    $region46: #{tpu_custom_call.1} parent=1 // pred_check
      _
    $region47: #{tpu_custom_call.1} parent=1 // pred_check_branch
      %355 = sbr.rel (0) target = $region49
    $region48: #{tpu_custom_call.1} parent=1 // pred_region
      %356 = dma.done [#allocation4], 256
    $region49: #{tpu_custom_call.1} parent=1 // pred_fallthru
      _
    %357 = vsyncpa [#allocation4], 1

</llo_original>
